<compile_context>
chip_gen: v5e
topology: v5e:2x2
jax: 0.10.0
libtpu: 0.0.40
codegen_flags: <defaults>
</compile_context>

<pallas_src>
from functools import partial

import jax
import jax.numpy as jnp
from jax import lax
from jax.experimental import pallas as pl
from jax.experimental.pallas import tpu as pltpu


# ~2 MiB per (2, bb, N) f32 block -> (in + out) x 2 double buffers ~ 8 MiB.
_TARGET_BLOCK_BYTES = 2 << 20


def _round_up(x, m):
    return -(-x // m) * m


def frustum_rotation_kernel(xy_ref, out_ref):
    """xy_ref / out_ref: (2, BB, N) f32 -- x plane then y plane, BB frustums,
    N points on the lane (last) axis."""
    x0 = xy_ref[0, :, :]                                     # (BB, N)
    x1 = xy_ref[1, :, :]                                     # (BB, N)
    n = x0.shape[-1]
    inv_n = 1.0 / n

    # Per-frustum mean of the x / y rows: one cross-lane reduction each (XLU).
    cx = jnp.sum(x0, axis=-1, keepdims=True) * inv_n         # (BB, 1)
    cy = jnp.sum(x1, axis=-1, keepdims=True) * inv_n         # (BB, 1)

    # rot = atan2(cy, cx); only cos(rot) / sin(rot) are needed:
    #   cos(atan2(y, x)) = x / hypot(x, y), sin(atan2(y, x)) = y / hypot(x, y).
    r2 = cx * cx + cy * cy
    nonzero = r2 > 0.0
    inv_r = jnp.where(nonzero, lax.rsqrt(r2), 0.0)
    cos_r = jnp.where(nonzero, cx * inv_r, 1.0)              # atan2(0,0)=0 -> cos=1
    sin_r = jnp.where(nonzero, cy * inv_r, 0.0)              #                 sin=0

    # Rotate (x, y) by -rot:  x' = x*cos + y*sin ;  y' = -x*sin + y*cos.
    out_ref[0, :, :] = x0 * cos_r + x1 * sin_r
    out_ref[1, :, :] = -x0 * sin_r + x1 * cos_r


def frustum_rotation_planes(points_dbn, *, target_block_bytes=_TARGET_BLOCK_BYTES):
    """Core kernel call. points_dbn: (D, B, N) float32, plane-major layout with
    rows (x, y, z, features...).  Returns the rotated points, same layout.
    Only the x / y planes are read & written; z / features pass through via
    the donated (aliased) buffer."""
    d, b, n = points_dbn.shape
    if d < 2:
        raise ValueError(f"need at least x and y planes, got D={d}")
    if points_dbn.dtype != jnp.float32:
        raise NotImplementedError("frustum_rotation kernel is float32-only")

    # Frustums per grid step: multiple of 8 (dense f32 sublanes), sized to the
    # VMEM byte budget, never larger than the (8-rounded) batch.
    bytes_per_frustum = 2 * n * points_dbn.dtype.itemsize
    bb = max(8, (target_block_bytes // bytes_per_frustum) // 8 * 8)
    b_pad = _round_up(b, 8)
    bb = min(bb, b_pad)
    b_pad = _round_up(b_pad, bb)          # bb divides the padded batch exactly

    if b_pad != b:
        # Zero-padded frustums compute a harmless identity rotation (center at
        # the origin is handled explicitly, so no NaNs) and are sliced off.
        points_dbn = jnp.pad(points_dbn, ((0, 0), (0, b_pad - b), (0, 0)))

    out = pl.pallas_call(
        frustum_rotation_kernel,
        out_shape=jax.ShapeDtypeStruct((d, b_pad, n), points_dbn.dtype),
        grid_spec=pltpu.PrefetchScalarGridSpec(
            num_scalar_prefetch=0,
            grid=(b_pad // bb,),
            # Leading D axis pinned to block 0 -> only the x / y planes move.
            in_specs=[pl.BlockSpec((2, bb, n), lambda i: (0, i, 0))],
            out_specs=pl.BlockSpec((2, bb, n), lambda i: (0, i, 0)),
        ),
        # Donate the input: planes >= 2 stay untouched in the aliased buffer,
        # halving HBM traffic (and more when extra feature columns exist).
        input_output_aliases={0: 0},
        compiler_params=pltpu.CompilerParams(
            dimension_semantics=("parallel",)),   # megacore sharding on v7x
    )(points_dbn)

    if b_pad != b:
        out = out[:, :b, :]
    return out


@partial(jax.jit, static_argnames=("target_block_bytes",))
def frustum_rotation_batched(points_bnd, *, target_block_bytes=_TARGET_BLOCK_BYTES):
    """Batched frustum rotation. points_bnd: (B, N, D) float32 with columns
    (x, y, z, features...).  The transposes to/from the plane-major (D, B, N)
    kernel layout are wrapper-side layout plumbing."""
    points_dbn = jnp.transpose(points_bnd, (2, 0, 1))        # (D, B, N)
    out_dbn = frustum_rotation_planes(points_dbn,
                                      target_block_bytes=target_block_bytes)
    return jnp.transpose(out_dbn, (1, 2, 0))                 # (B, N, D)


@jax.jit
def frustum_rotation(points_nd):
    """Single-frustum interface matching FrustumRotation.forward(points).
    points_nd: (N, D) float32."""
    return frustum_rotation_batched(points_nd[None])[0]


def _reference(points):
    """Pure-JAX reference mirroring the PyTorch module."""
    center = jnp.mean(points, axis=0)
    rot = jnp.arctan2(center[1], center[0])
    a = -rot
    cosa, sina = jnp.cos(a), jnp.sin(a)
    zero = jnp.zeros_like(cosa)
    rot_mat = jnp.stack([
        jnp.stack([cosa, sina, zero]),
        jnp.stack([-sina, cosa, zero]),
        jnp.array([0.0, 0.0, 1.0], jnp.float32),
    ])
    xyz = points[:, :3] @ rot_mat
    return jnp.concatenate([xyz, points[:, 3:]], axis=-1)


if __name__ == "__main__":
    key = jax.random.PRNGKey(0)
    B, N, D = 16, 256, 4  # B frustums, N points, columns = (x, y, z, intensity)

    k_xyz, k_feat = jax.random.split(key)
    xyz = jax.random.uniform(k_xyz, (B, N, 3), jnp.float32, minval=-1.0, maxval=1.0)
    xyz = xyz * jnp.array([10.0, 5.0, 2.0], jnp.float32) + jnp.array(
        [20.0, 3.0, 0.0], jnp.float32)
    feat = jax.random.uniform(k_feat, (B, N, 1), jnp.float32)
    points_bnd = jnp.concatenate([xyz, feat], axis=-1)        # (B, N, D)

    ref = jax.vmap(_reference)(points_bnd)

    # 1) Default block sizing (single grid step at this small B).
    out_bnd = jax.block_until_ready(frustum_rotation_batched(points_bnd))
    assert out_bnd.shape == points_bnd.shape and out_bnd.dtype == points_bnd.dtype
    err = float(jnp.max(jnp.abs(out_bnd - ref)))
    assert jnp.allclose(out_bnd, ref, atol=1e-4, rtol=1e-5), err
    # z / feature columns pass through the aliased buffer untouched: bit-exact.
    assert bool(jnp.all(out_bnd[..., 2:] == points_bnd[..., 2:]))

    # 2) Small block budget -> multi-step grid; exercises pipelining + aliasing
    #    correctness across grid steps.
    out_small = jax.block_until_ready(
        frustum_rotation_batched(points_bnd, target_block_bytes=16 * 1024))
    assert jnp.allclose(out_small, ref, atol=1e-4, rtol=1e-5)

    # 3) Ragged batch (B=13): exercises the batch zero-padding path.
    out_ragged = jax.block_until_ready(frustum_rotation_batched(points_bnd[:13]))
    assert jnp.allclose(out_ragged, ref[:13], atol=1e-4, rtol=1e-5)

    # 4) Single-frustum wrapper mirrors the original module interface exactly.
    single = jax.block_until_ready(frustum_rotation(points_bnd[0]))
    ref0 = _reference(points_bnd[0])
    assert jnp.allclose(single, ref0, atol=1e-4, rtol=1e-5)

    print("KERNEL_OK")
</pallas_src>

<mosaic_0001>
module attributes {stable_mosaic.version = 11 : i64} {
  func.func @frustum_rotation_kernel(%arg0: i32, %arg1: memref<2x16x256xf32, #tpu.memory_space<vmem>>, %arg2: memref<2x16x256xf32, #tpu.memory_space<vmem>>) attributes {dimension_semantics = [#tpu.dimension_semantics<parallel>], iteration_bounds = array<i64: 1>, scalar_prefetch = 0 : i64, scratch_operands = 0 : i64, tpu.core_type = #tpu.core_type<tc>, window_params = [{transform_indices = @transform_0, window_bounds = array<i64: 2, 16, 256>}, {transform_indices = @transform_1, window_bounds = array<i64: 2, 16, 256>}]} {
    %c0 = arith.constant 0 : index
    %c0_0 = arith.constant 0 : index
    %c0_1 = arith.constant 0 : index
    %0 = vector.load %arg1[%c0, %c0_0, %c0_1] : memref<2x16x256xf32, #tpu.memory_space<vmem>>, vector<1x16x256xf32>
    %1 = vector.shape_cast %0 : vector<1x16x256xf32> to vector<16x256xf32>
    %c1 = arith.constant 1 : index
    %c0_2 = arith.constant 0 : index
    %c0_3 = arith.constant 0 : index
    %2 = vector.load %arg1[%c1, %c0_2, %c0_3] : memref<2x16x256xf32, #tpu.memory_space<vmem>>, vector<1x16x256xf32>
    %3 = vector.shape_cast %2 : vector<1x16x256xf32> to vector<16x256xf32>
    %cst = arith.constant dense<0.000000e+00> : vector<16xf32>
    %4 = vector.multi_reduction <add>, %1, %cst [1] : vector<16x256xf32> to vector<16xf32>
    %5 = vector.shape_cast %4 : vector<16xf32> to vector<16x1xf32>
    %cst_4 = arith.constant 3.906250e-03 : f32
    %6 = vector.broadcast %cst_4 : f32 to vector<16x1xf32>
    %7 = arith.mulf %5, %6 : vector<16x1xf32>
    %cst_5 = arith.constant dense<0.000000e+00> : vector<16xf32>
    %8 = vector.multi_reduction <add>, %3, %cst_5 [1] : vector<16x256xf32> to vector<16xf32>
    %9 = vector.shape_cast %8 : vector<16xf32> to vector<16x1xf32>
    %cst_6 = arith.constant 3.906250e-03 : f32
    %10 = vector.broadcast %cst_6 : f32 to vector<16x1xf32>
    %11 = arith.mulf %9, %10 : vector<16x1xf32>
    %12 = arith.mulf %7, %7 : vector<16x1xf32>
    %13 = arith.mulf %11, %11 : vector<16x1xf32>
    %14 = arith.addf %12, %13 : vector<16x1xf32>
    %cst_7 = arith.constant 0.000000e+00 : f32
    %15 = vector.broadcast %cst_7 : f32 to vector<16x1xf32>
    %16 = arith.cmpf ogt, %14, %15 : vector<16x1xf32>
    %17 = math.rsqrt %14 : vector<16x1xf32>
    %cst_8 = arith.constant 0.000000e+00 : f32
    %18 = vector.broadcast %cst_8 : f32 to vector<16x1xf32>
    %19 = arith.select %16, %17, %18 : vector<16x1xi1>, vector<16x1xf32>
    %20 = arith.mulf %7, %19 : vector<16x1xf32>
    %cst_9 = arith.constant 1.000000e+00 : f32
    %21 = vector.broadcast %cst_9 : f32 to vector<16x1xf32>
    %22 = arith.select %16, %20, %21 : vector<16x1xi1>, vector<16x1xf32>
    %23 = arith.mulf %11, %19 : vector<16x1xf32>
    %cst_10 = arith.constant 0.000000e+00 : f32
    %24 = vector.broadcast %cst_10 : f32 to vector<16x1xf32>
    %25 = arith.select %16, %23, %24 : vector<16x1xi1>, vector<16x1xf32>
    %26 = vector.broadcast %22 : vector<16x1xf32> to vector<16x256xf32>
    %27 = arith.mulf %1, %26 : vector<16x256xf32>
    %28 = vector.broadcast %25 : vector<16x1xf32> to vector<16x256xf32>
    %29 = arith.mulf %3, %28 : vector<16x256xf32>
    %30 = arith.addf %27, %29 : vector<16x256xf32>
    %c0_11 = arith.constant 0 : index
    %c0_12 = arith.constant 0 : index
    %c0_13 = arith.constant 0 : index
    %31 = vector.load %arg2[%c0_11, %c0_12, %c0_13] : memref<2x16x256xf32, #tpu.memory_space<vmem>>, vector<1x16x256xf32>
    %32 = vector.shape_cast %31 : vector<1x16x256xf32> to vector<16x256xf32>
    %33 = vector.shape_cast %30 : vector<16x256xf32> to vector<1x16x256xf32>
    tpu.vector_store %arg2[%c0_11, %c0_12, %c0_13], %33 {strides = array<i32>} : memref<2x16x256xf32, #tpu.memory_space<vmem>>, vector<1x16x256xf32>,
    %cst_14 = arith.constant 0.000000e+00 : f32
    %34 = vector.broadcast %cst_14 : f32 to vector<16x256xf32>
    %35 = arith.subf %34, %1 : vector<16x256xf32>
    %36 = vector.broadcast %25 : vector<16x1xf32> to vector<16x256xf32>
    %37 = arith.mulf %35, %36 : vector<16x256xf32>
    %38 = vector.broadcast %22 : vector<16x1xf32> to vector<16x256xf32>
    %39 = arith.mulf %3, %38 : vector<16x256xf32>
    %40 = arith.addf %37, %39 : vector<16x256xf32>
    %c1_15 = arith.constant 1 : index
    %c0_16 = arith.constant 0 : index
    %c0_17 = arith.constant 0 : index
    %41 = vector.load %arg2[%c1_15, %c0_16, %c0_17] : memref<2x16x256xf32, #tpu.memory_space<vmem>>, vector<1x16x256xf32>
    %42 = vector.shape_cast %41 : vector<1x16x256xf32> to vector<16x256xf32>
    %43 = vector.shape_cast %40 : vector<16x256xf32> to vector<1x16x256xf32>
    tpu.vector_store %arg2[%c1_15, %c0_16, %c0_17], %43 {strides = array<i32>} : memref<2x16x256xf32, #tpu.memory_space<vmem>>, vector<1x16x256xf32>,
    return
  }
  func.func @transform_0(%arg0: i32) -> (i32, i32, i32) {
    %c0_i32 = arith.constant 0 : i32
    %c0_i32_0 = arith.constant 0 : i32
    %c0_i32_1 = arith.constant 0 : i32
    return %c0_i32, %arg0, %c0_i32_0 : i32, i32, i32
  }
  func.func @transform_1(%arg0: i32) -> (i32, i32, i32) {
    %c0_i32 = arith.constant 0 : i32
    %c0_i32_0 = arith.constant 0 : i32
    %c0_i32_1 = arith.constant 0 : i32
    return %c0_i32, %arg0, %c0_i32_0 : i32, i32, i32
  }
}

</mosaic_0001>

<llo_original>
// kernel: frustum_rotation_batched.1
$region0: #{frustum_rotation_batched.1}
  #allocation0 [shape = 'u32[]', space=smem, size = 0x4, offset = 0x4, fixed_abs, tag = 'smem constant byte address 0x4 - core index']
  #allocation1 [shape = 'u32[72,128]{1,0:T(1,128)}', space=vmem, size = 0x9000, scoped, tag = 'internal scratch']
  %s0 = inlined_call_operand.vmem [shape: f32[4,16,256], index: 0, kind: input, shape index: {}, may-alias: {0,1}]
  %s1 = inlined_call_operand.vmem [shape: f32[4,16,256], index: 1, kind: output, shape index: {}, may-alias: {0,1}]
  %s2 = sld [smem:[#allocation0]]
  $region14: #{frustum_rotation_batched.1} parent=0
    _
  %s4 = ssub.s32 1, %s2
  %s5 = scalar_select 0, %s4, %s2
  // Predicated region
  $region2: #{frustum_rotation_batched.1} parent=0 // pred_check
    _
  $region3: #{frustum_rotation_batched.1} parent=0 // pred_check_branch
    %7 = sbr.rel (0) target = $region5
  $region4: #{frustum_rotation_batched.1} parent=0 // pred_region
    _
  $region5: #{frustum_rotation_batched.1} parent=0 // pred_fallthru
    _
  %v8 = vld [vmem:[%s0] sm:$0xff]
  %v9 = vld [vmem:[%s0 + $0x8] sm:$0xff]
  %v10 = vld [vmem:[%s0 + $0x10] sm:$0xff]
  %v11 = vld [vmem:[%s0 + $0x18] sm:$0xff]
  %s12 = scalar_lea.vmem %s0, 32
  %v13 = vld [vmem:[%s12] sm:$0xff]
  %v14 = vld [vmem:[%s12 + $0x8] sm:$0xff]
  %v15 = vld [vmem:[%s12 + $0x10] sm:$0xff]
  %v16 = vld [vmem:[%s12 + $0x18] sm:$0xff]
  %v17 = vadd.f32 %v8, %v9
  %18 = vadd.xlane.f32.xlu0 %v17
  %v19 = vpop.xlane.xlu0 %18
  %v20 = vadd.f32 %v10, %v11
  %21 = vadd.xlane.f32.xlu0 %v20
  %v22 = vpop.xlane.xlu0 %21
  %v23 = vmul.f32 %v19, 0.00390625
  %v24 = vmul.f32 %v22, 0.00390625
  %v25 = vadd.f32 %v13, %v14
  %26 = vadd.xlane.f32.xlu0 %v25
  %v27 = vpop.xlane.xlu0 %26
  %v28 = vadd.f32 %v15, %v16
  %29 = vadd.xlane.f32.xlu0 %v28
  %v30 = vpop.xlane.xlu0 %29
  %v31 = vmul.f32 %v27, 0.00390625
  %v32 = vmul.f32 %v30, 0.00390625
  %v33 = vmul.f32 %v23, %v23
  %v34 = vmul.f32 %v24, %v24
  %v35 = vmul.f32 %v31, %v31
  %v36 = vmul.f32 %v32, %v32
  %v37 = vadd.f32 %v33, %v35
  %v38 = vadd.f32 %v34, %v36
  %vm39 = vcmp.gt.f32.partialorder %v37, 0.0
  %vm40 = vcmp.gt.f32.partialorder %v38, 0.0
  %v41 = vrsqrt.pop %v37
  %v42 = vmul.f32 %v41, %v37
  %v43 = vmul.f32 %v42, %v41
  %v44 = vmul.f32 0.5, %v43
  %v45 = vsub.f32 1.5, %v44
  %v46 = vmul.f32 %v41, %v45
  %vm47 = vweird.f32 %v37
  %vm48 = vweird.f32 %v41
  %vm49 = vmor %vm47, %vm48
  %v50 = vsel %vm49, %v41, %v46
  %v51 = vrsqrt.pop %v38
  %v52 = vmul.f32 %v51, %v38
  %v53 = vmul.f32 %v52, %v51
  %v54 = vmul.f32 0.5, %v53
  %v55 = vsub.f32 1.5, %v54
  %v56 = vmul.f32 %v51, %v55
  %vm57 = vweird.f32 %v38
  %vm58 = vweird.f32 %v51
  %vm59 = vmor %vm57, %vm58
  %v60 = vsel %vm59, %v51, %v56
  %v61 = vsel %vm39, %v50, 0.0
  %v62 = vsel %vm40, %v60, 0.0
  %v63 = vmul.f32 %v23, %v61
  %v64 = vmul.f32 %v24, %v62
  %v65 = vsel %vm39, %v63, 1.0
  %v66 = vsel %vm40, %v64, 1.0
  %v67 = vmul.f32 %v31, %v61
  %v68 = vmul.f32 %v32, %v62
  %v69 = vsel %vm39, %v67, 0.0
  %v70 = vsel %vm40, %v68, 0.0
  %v71 = vmul.f32 %v8, %v65
  %v72 = vmul.f32 %v9, %v65
  %v73 = vmul.f32 %v10, %v66
  %v74 = vmul.f32 %v11, %v66
  %v75 = vmul.f32 %v13, %v69
  %v76 = vmul.f32 %v14, %v69
  %v77 = vmul.f32 %v15, %v70
  %v78 = vmul.f32 %v16, %v70
  %v79 = vadd.f32 %v71, %v75
  %v80 = vadd.f32 %v72, %v76
  %v81 = vadd.f32 %v73, %v77
  %v82 = vadd.f32 %v74, %v78
  %83 = vst [vmem:[%s1] sm:$0xff] %v79
  %84 = vst [vmem:[%s1 + $0x8] sm:$0xff] %v80
  %85 = vst [vmem:[%s1 + $0x10] sm:$0xff] %v81
  %86 = vst [vmem:[%s1 + $0x18] sm:$0xff] %v82
  %v87 = vsub.f32 0.0, %v8
  %v88 = vsub.f32 0.0, %v9
  %v89 = vsub.f32 0.0, %v10
  %v90 = vsub.f32 0.0, %v11
  %v91 = vmul.f32 %v87, %v69
  %v92 = vmul.f32 %v88, %v69
  %v93 = vmul.f32 %v89, %v70
  %v94 = vmul.f32 %v90, %v70
  %v95 = vmul.f32 %v13, %v65
  %v96 = vmul.f32 %v14, %v65
  %v97 = vmul.f32 %v15, %v66
  %v98 = vmul.f32 %v16, %v66
  %v99 = vadd.f32 %v91, %v95
  %v100 = vadd.f32 %v92, %v96
  %v101 = vadd.f32 %v93, %v97
  %v102 = vadd.f32 %v94, %v98
  %s103 = scalar_lea.vmem %s1, 32
  %104 = vst [vmem:[%s103] sm:$0xff] %v99
  %105 = vst [vmem:[%s103 + $0x8] sm:$0xff] %v100
  %106 = vst [vmem:[%s103 + $0x10] sm:$0xff] %v101
  %107 = vst [vmem:[%s103 + $0x18] sm:$0xff] %v102
  // Predicated region
  $region6: #{frustum_rotation_batched.1} parent=0 // pred_check
    _
  $region7: #{frustum_rotation_batched.1} parent=0 // pred_check_branch
    %109 = sbr.rel (0) target = $region9
  $region8: #{frustum_rotation_batched.1} parent=0 // pred_region
    _
  $region9: #{frustum_rotation_batched.1} parent=0 // pred_fallthru
    _
  // Predicated region
  $region10: #{frustum_rotation_batched.1} parent=0 // pred_check
    _
  $region11: #{frustum_rotation_batched.1} parent=0 // pred_check_branch
    %111 = sbr.rel (0) target = $region13
  $region12: #{frustum_rotation_batched.1} parent=0 // pred_region
    _
  $region13: #{frustum_rotation_batched.1} parent=0 // pred_fallthru
    _

</llo_original>
